<compile_context>
chip_gen: v7x
topology: tpu7x:2x2x1
jax: 0.10.0
libtpu: 0.0.40
codegen_flags: <defaults>
</compile_context>

<pallas_src>
import math

import jax
import jax.numpy as jnp
from jax import lax
from jax.experimental import pallas as pl
from jax.experimental.pallas import tpu as pltpu

D_MODEL = 32          # d_model (divisible by nhead=8)
NTOKEN = 66           # len(token_index_codon)  (alphabet_string != 'aa')
MASK_START = 27       # forward: output[:, 27:] = -10000000.0
MASK_VAL = -10000000.0

TBL_ROWS = 128        # padded table rows (>= NTOKEN); matches onehot width / MXU K dim
MAX_TILE_S = 4096     # rows per grid step (VMEM-safe on all generations, see header)


def _round_up(x, m):
    return ((x + m - 1) // m) * m


# ---------------------------------------------------------------------------
# One-shot kernel: per-token-id probability table
#   T[t] = softmax(mask(E[t] @ (sqrt(D)*W^T) + b))        -> (TBL_ROWS, NTOKEN)
# ---------------------------------------------------------------------------
def token_table_kernel(e_ref, w_ref, b_ref, t_ref):
    logits = jnp.dot(e_ref[...], w_ref[...], preferred_element_type=jnp.float32) + b_ref[...]
    # output[:, 27:] = -1e7
    col = lax.broadcasted_iota(jnp.int32, logits.shape, 1)
    logits = jnp.where(col >= MASK_START, jnp.float32(MASK_VAL), logits)
    # numerically stable softmax over the last dim (== torch dim=1); masked cols underflow
    # to exactly +0.0.  Exact division (not approx reciprocal) — this kernel runs once.
    m = jnp.max(logits, axis=-1, keepdims=True)
    e = jnp.exp(logits - m)
    t_ref[...] = e / jnp.sum(e, axis=-1, keepdims=True)


def build_prob_table(emb_table, lin_w, lin_b):
    """Run once per weight set (hoisted off the per-call forward path)."""
    e_pad = jnp.zeros((TBL_ROWS, D_MODEL), jnp.float32).at[:NTOKEN].set(
        emb_table.astype(jnp.float32))
    # nn.Linear computes x @ W^T + b; fold sqrt(d_model) into the tiny constant weight.
    w_scaled = lin_w.T.astype(jnp.float32) * jnp.float32(math.sqrt(D_MODEL))   # (D, NTOKEN)
    b = lin_b.astype(jnp.float32).reshape(1, NTOKEN)

    return pl.pallas_call(
        token_table_kernel,
        out_shape=jax.ShapeDtypeStruct((TBL_ROWS, NTOKEN), jnp.float32),
        grid=(1,),
        in_specs=[
            pl.BlockSpec((TBL_ROWS, D_MODEL), lambda i: (0, 0)),
            pl.BlockSpec((D_MODEL, NTOKEN), lambda i: (0, 0)),
            pl.BlockSpec((1, NTOKEN), lambda i: (0, 0)),
        ],
        out_specs=pl.BlockSpec((TBL_ROWS, NTOKEN), lambda i: (0, 0)),
    )(e_pad, w_scaled, b)


# ---------------------------------------------------------------------------
# Hot path: out[s] = T[src[s]], vectorized as onehot(src) @ T on the MXU.
# ---------------------------------------------------------------------------
def gather_rows_kernel(src_ref, tbl_ref, o_ref):
    """src_ref: (tile_s, 1) int32 ids; tbl_ref: (TBL_ROWS, NTOKEN) f32; o_ref: (tile_s, NTOKEN)."""
    idx = src_ref[...]                                                     # (tile_s, 1)
    # One lane-broadcast compare per tile builds the onehot; VPU/XLU work hides under the DMA.
    rows = lax.broadcasted_iota(jnp.int32, (idx.shape[0], TBL_ROWS), 1)    # (tile_s, 128)
    onehot = (rows == idx).astype(jnp.float32)
    o_ref[...] = jnp.dot(onehot, tbl_ref[...], preferred_element_type=jnp.float32)


@jax.jit
def dummy_model_forward(src, tbl):
    """src: (S,) int token ids in [0, NTOKEN); tbl: precomputed (TBL_ROWS, NTOKEN) table.

    Returns (S, NTOKEN) f32 softmax output — written directly by the kernel (no post-slice).
    """
    S = src.shape[0]
    # Size tiles so the 'parallel' grid gives both v7x TensorCores work (>= 2 tiles when
    # S > 8), capped at MAX_TILE_S rows for VMEM safety on every generation.
    tile_s = max(8, min(MAX_TILE_S, _round_up(-(-S // 2), 8)))
    n_tiles = -(-S // tile_s)                      # partial last block handled by Pallas
    src_2d = src.astype(jnp.int32).reshape(S, 1)

    return pl.pallas_call(
        gather_rows_kernel,
        out_shape=jax.ShapeDtypeStruct((S, NTOKEN), jnp.float32),
        grid=(n_tiles,),
        in_specs=[
            pl.BlockSpec((tile_s, 1), lambda i: (i, 0)),
            pl.BlockSpec((TBL_ROWS, NTOKEN), lambda i: (0, 0)),   # block index constant -> fetched once
        ],
        out_specs=pl.BlockSpec((tile_s, NTOKEN), lambda i: (i, 0)),
        compiler_params=pltpu.CompilerParams(
            dimension_semantics=("parallel",),
            vmem_limit_bytes=32 * 1024 * 1024,     # explicit so v5e's 16 MiB default never binds
        ),
    )(src_2d, tbl)


def dummy_model_forward_ref(src, emb_table, lin_w, lin_b):
    """Plain-JAX reference mirroring the PyTorch forward (for correctness check)."""
    x = emb_table[src] * jnp.float32(math.sqrt(D_MODEL))
    logits = x @ lin_w.T + lin_b
    logits = logits.at[:, MASK_START:].set(jnp.float32(MASK_VAL))
    return jax.nn.softmax(logits, axis=-1)


if __name__ == "__main__":
    key = jax.random.PRNGKey(0)
    k_emb, k_lin, k_src1, k_src2 = jax.random.split(key, 4)

    # init_weights(): embedding.weight ~ U(-0.1, 0.1); linear.weight ~ U(-0.1, 0.1); bias = 0
    emb_table = jax.random.uniform(k_emb, (NTOKEN, D_MODEL), jnp.float32, -0.1, 0.1)
    lin_w = jax.random.uniform(k_lin, (NTOKEN, D_MODEL), jnp.float32, -0.1, 0.1)
    lin_b = jnp.zeros((NTOKEN,), jnp.float32)

    # One-shot table build (hoisted out of the per-call forward).
    tbl = jax.block_until_ready(build_prob_table(emb_table, lin_w, lin_b))

    # Small sequence (single-tile path).
    S = 8
    src = jax.random.randint(k_src1, (S,), 0, NTOKEN, dtype=jnp.int32)
    out = jax.block_until_ready(dummy_model_forward(src, tbl))
    ref = dummy_model_forward_ref(src, emb_table, lin_w, lin_b)

    assert out.shape == (S, NTOKEN)
    assert bool(jnp.all(jnp.isfinite(out)))
    assert bool(jnp.allclose(jnp.sum(out, axis=-1), 1.0, atol=5e-3))
    assert bool(jnp.max(jnp.abs(out[:, MASK_START:])) <= 1e-12)   # masked vocab -> exactly 0
    assert bool(jnp.allclose(out, ref, atol=2e-3, rtol=2e-3))

    # Larger, non-multiple-of-tile sequence: exercises the 2-tile grid + partial last block.
    S2 = 300
    src2 = jax.random.randint(k_src2, (S2,), 0, NTOKEN, dtype=jnp.int32)
    out2 = jax.block_until_ready(dummy_model_forward(src2, tbl))
    ref2 = dummy_model_forward_ref(src2, emb_table, lin_w, lin_b)
    assert out2.shape == (S2, NTOKEN)
    assert bool(jnp.max(jnp.abs(out2[:, MASK_START:])) <= 1e-12)
    assert bool(jnp.allclose(out2, ref2, atol=2e-3, rtol=2e-3))

    # TODO(synk): transformer_encoder / transformer_decoder / pos_encoder / nn.ReLU(src) are
    # constructed in __init__ (or are dead code in forward) and never affect the output, so
    # they are intentionally not implemented.
    print("KERNEL_OK")
</pallas_src>

<mosaic_0001>
module attributes {stable_mosaic.version = 11 : i64} {
  func.func @token_table_kernel(%arg0: i32, %arg1: memref<128x32xf32, #tpu.memory_space<vmem>>, %arg2: memref<32x66xf32, #tpu.memory_space<vmem>>, %arg3: memref<1x66xf32, #tpu.memory_space<vmem>>, %arg4: memref<128x66xf32, #tpu.memory_space<vmem>>) attributes {dimension_semantics = [#tpu.dimension_semantics<arbitrary>], iteration_bounds = array<i64: 1>, scalar_prefetch = 0 : i64, scratch_operands = 0 : i64, tpu.core_type = #tpu.core_type<tc>, window_params = [{pipeline_mode = #tpu.pipeline_mode<synchronous>, transform_indices = @transform_0, window_bounds = array<i64: 128, 32>}, {pipeline_mode = #tpu.pipeline_mode<synchronous>, transform_indices = @transform_1, window_bounds = array<i64: 32, 66>}, {pipeline_mode = #tpu.pipeline_mode<synchronous>, transform_indices = @transform_2, window_bounds = array<i64: 1, 66>}, {pipeline_mode = #tpu.pipeline_mode<synchronous>, transform_indices = @transform_3, window_bounds = array<i64: 128, 66>}]} {
    %c0 = arith.constant 0 : index
    %c0_0 = arith.constant 0 : index
    %0 = vector.load %arg1[%c0, %c0_0] : memref<128x32xf32, #tpu.memory_space<vmem>>, vector<128x32xf32>
    %c0_1 = arith.constant 0 : index
    %c0_2 = arith.constant 0 : index
    %1 = vector.load %arg2[%c0_1, %c0_2] : memref<32x66xf32, #tpu.memory_space<vmem>>, vector<32x66xf32>
    %cst = arith.constant dense<0.000000e+00> : vector<128x66xf32>
    %2 = tpu.matmul %0, %1, %cst {dimension_numbers = #tpu.dot_dimension_numbers<[1], [0], [0], [1], [0, 0, 1, 1], [], []>} : vector<128x32xf32>, vector<32x66xf32>, vector<128x66xf32> -> vector<128x66xf32>
    %c0_3 = arith.constant 0 : index
    %c0_4 = arith.constant 0 : index
    %3 = vector.load %arg3[%c0_3, %c0_4] : memref<1x66xf32, #tpu.memory_space<vmem>>, vector<1x66xf32>
    %4 = vector.broadcast %3 : vector<1x66xf32> to vector<128x66xf32>
    %5 = arith.addf %2, %4 : vector<128x66xf32>
    %6 = tpu.iota {dimensions = array<i32: 1>} : vector<128x66xi32>
    %c27_i32 = arith.constant 27 : i32
    %7 = vector.broadcast %c27_i32 : i32 to vector<128x66xi32>
    %8 = arith.cmpi sge, %6, %7 : vector<128x66xi32>
    %cst_5 = arith.constant -1.000000e+07 : f32
    %9 = vector.broadcast %cst_5 : f32 to vector<128x66xf32>
    %10 = arith.select %8, %9, %5 : vector<128x66xi1>, vector<128x66xf32>
    %cst_6 = arith.constant dense<0xFF800000> : vector<128xf32>
    %11 = vector.multi_reduction <maximumf>, %10, %cst_6 [1] : vector<128x66xf32> to vector<128xf32>
    %12 = vector.shape_cast %11 : vector<128xf32> to vector<128x1xf32>
    %13 = vector.broadcast %12 : vector<128x1xf32> to vector<128x66xf32>
    %14 = arith.subf %10, %13 : vector<128x66xf32>
    %15 = math.exp %14 : vector<128x66xf32>
    %cst_7 = arith.constant dense<0.000000e+00> : vector<128xf32>
    %16 = vector.multi_reduction <add>, %15, %cst_7 [1] : vector<128x66xf32> to vector<128xf32>
    %17 = vector.shape_cast %16 : vector<128xf32> to vector<128x1xf32>
    %18 = vector.broadcast %17 : vector<128x1xf32> to vector<128x66xf32>
    %19 = arith.divf %15, %18 : vector<128x66xf32>
    %c0_8 = arith.constant 0 : index
    %c0_9 = arith.constant 0 : index
    %20 = vector.load %arg4[%c0_8, %c0_9] : memref<128x66xf32, #tpu.memory_space<vmem>>, vector<128x66xf32>
    tpu.vector_store %arg4[%c0_8, %c0_9], %19 {strides = array<i32>} : memref<128x66xf32, #tpu.memory_space<vmem>>, vector<128x66xf32>,
    return
  }
  func.func @transform_0(%arg0: i32) -> (i32, i32) {
    %c0_i32 = arith.constant 0 : i32
    %c0_i32_0 = arith.constant 0 : i32
    %c0_i32_1 = arith.constant 0 : i32
    return %c0_i32, %c0_i32_0 : i32, i32
  }
  func.func @transform_1(%arg0: i32) -> (i32, i32) {
    %c0_i32 = arith.constant 0 : i32
    %c0_i32_0 = arith.constant 0 : i32
    %c0_i32_1 = arith.constant 0 : i32
    return %c0_i32, %c0_i32_0 : i32, i32
  }
  func.func @transform_2(%arg0: i32) -> (i32, i32) {
    %c0_i32 = arith.constant 0 : i32
    %c0_i32_0 = arith.constant 0 : i32
    %c0_i32_1 = arith.constant 0 : i32
    return %c0_i32, %c0_i32_0 : i32, i32
  }
  func.func @transform_3(%arg0: i32) -> (i32, i32) {
    %c0_i32 = arith.constant 0 : i32
    %c0_i32_0 = arith.constant 0 : i32
    %c0_i32_1 = arith.constant 0 : i32
    return %c0_i32, %c0_i32_0 : i32, i32
  }
}

</mosaic_0001>

<llo_original>
// kernel: tpu_custom_call.1
$region0: #{tpu_custom_call.1}
  #allocation0 [shape = 'u32[]', space=smem, size = 0x4, offset = 0x4, fixed_abs, tag = 'smem constant byte address 0x4 - core index']
  #allocation1 [shape = 'u32[144,128]{1,0:T(1,128)}', space=vmem, size = 0x12000, scoped, tag = 'internal scratch']
  %s0 = inlined_call_operand.vmem [shape: f32[128,32], index: 0, kind: input, shape index: {}]
  %s1 = inlined_call_operand.vmem [shape: f32[32,66], index: 1, kind: input, shape index: {}]
  %s2 = inlined_call_operand.vmem [shape: f32[1,66], index: 2, kind: input, shape index: {}]
  %s3 = inlined_call_operand.vmem [shape: f32[128,66], index: 3, kind: output, shape index: {}]
  %s4 = sld [smem:[#allocation0]]
  $region22: #{tpu_custom_call.1} parent=0
    _
  %s6 = ssub.s32 1, %s4
  %s7 = scalar_select 0, %s6, %s4
  // Predicated region
  $region2: #{tpu_custom_call.1} parent=0 // pred_check
    _
  $region3: #{tpu_custom_call.1} parent=0 // pred_check_branch
    %9 = sbr.rel (0) target = $region5
  $region4: #{tpu_custom_call.1} parent=0 // pred_region
    _
  $region5: #{tpu_custom_call.1} parent=0 // pred_fallthru
    _
  // Predicated region
  $region6: #{tpu_custom_call.1} parent=0 // pred_check
    _
  $region7: #{tpu_custom_call.1} parent=0 // pred_check_branch
    %11 = sbr.rel (0) target = $region9
  $region8: #{tpu_custom_call.1} parent=0 // pred_region
    _
  $region9: #{tpu_custom_call.1} parent=0 // pred_fallthru
    _
  // Predicated region
  $region10: #{tpu_custom_call.1} parent=0 // pred_check
    _
  $region11: #{tpu_custom_call.1} parent=0 // pred_check_branch
    %13 = sbr.rel (0) target = $region13
  $region12: #{tpu_custom_call.1} parent=0 // pred_region
    _
  $region13: #{tpu_custom_call.1} parent=0 // pred_fallthru
    _
  %v14 = vld [vmem:[%s0] sm:$0xff]
  %v15 = vld [vmem:[%s0 + $0x8] sm:$0xff]
  %v16 = vld [vmem:[%s0 + $0x10] sm:$0xff]
  %v17 = vld [vmem:[%s0 + $0x18] sm:$0xff]
  %v18 = vld [vmem:[%s0 + $0x20] sm:$0xff]
  %v19 = vld [vmem:[%s0 + $0x28] sm:$0xff]
  %v20 = vld [vmem:[%s0 + $0x30] sm:$0xff]
  %v21 = vld [vmem:[%s0 + $0x38] sm:$0xff]
  %v22 = vld [vmem:[%s0 + $0x40] sm:$0xff]
  %v23 = vld [vmem:[%s0 + $0x48] sm:$0xff]
  %v24 = vld [vmem:[%s0 + $0x50] sm:$0xff]
  %v25 = vld [vmem:[%s0 + $0x58] sm:$0xff]
  %v26 = vld [vmem:[%s0 + $0x60] sm:$0xff]
  %v27 = vld [vmem:[%s0 + $0x68] sm:$0xff]
  %v28 = vld [vmem:[%s0 + $0x70] sm:$0xff]
  %v29 = vld [vmem:[%s0 + $0x78] sm:$0xff]
  %v30 = vld [vmem:[%s1] sm:$0xff]
  %v31 = vld [vmem:[%s1 + $0x8] sm:$0xff]
  %v32 = vld [vmem:[%s1 + $0x10] sm:$0xff]
  %v33 = vld [vmem:[%s1 + $0x18] sm:$0xff]
  %v34 = vld [vmem:[%s2] sm:$0x1]
  %v36 = vlaneseq
  %v37 = vshrl.u32 %v36, 7
  %v38 = vsub.s32 0, %v37
  %v39 = vrot.slane %v34, %v38
  %vm41 = vcmask 261120
  %v43 = vsel %vm41, %v14, 0
  %v46 = vsel %vm41, %v15, 0
  %v49 = vsel %vm41, %v16, 0
  %v52 = vsel %vm41, %v17, 0
  %v55 = vsel %vm41, %v18, 0
  %v58 = vsel %vm41, %v19, 0
  %v61 = vsel %vm41, %v20, 0
  %v64 = vsel %vm41, %v21, 0
  %v67 = vsel %vm41, %v22, 0
  %v70 = vsel %vm41, %v23, 0
  %v73 = vsel %vm41, %v24, 0
  %v76 = vsel %vm41, %v25, 0
  %v79 = vsel %vm41, %v26, 0
  %v82 = vsel %vm41, %v27, 0
  %v85 = vsel %vm41, %v28, 0
  %v88 = vsel %vm41, %v29, 0
  %90 = vmatprep.subr.mxu0 0.0
  %91 = vmatpush1.msra.mxu0 %v30
  %92 = vmatprep.subr.mxu0 0.0
  %93 = vmatpush1.msra.mxu0 %v31
  %94 = vmatprep.subr.mxu0 0.0
  %95 = vmatpush1.msra.mxu0 %v32
  %96 = vmatprep.subr.mxu0 0.0
  %97 = vmatpush1.msra.mxu0 %v33
  %98 = vmatprep.subr.mxu0 0.0
  %99 = vmatpush1.msra.mxu0 0.0
  %100 = vmatprep.subr.mxu0 0.0
  %101 = vmatpush1.msra.mxu0 0.0
  %102 = vmatprep.subr.mxu0 0.0
  %103 = vmatpush1.msra.mxu0 0.0
  %104 = vmatprep.subr.mxu0 0.0
  %105 = vmatpush1.msra.mxu0 0.0
  %106 = vmatprep.subr.mxu0 0.0
  %107 = vmatpush1.msra.mxu0 0.0
  %108 = vmatprep.subr.mxu0 0.0
  %109 = vmatpush1.msra.mxu0 0.0
  %110 = vmatprep.subr.mxu0 0.0
  %111 = vmatpush1.msra.mxu0 0.0
  %112 = vmatprep.subr.mxu0 0.0
  %113 = vmatpush1.msra.mxu0 0.0
  %114 = vmatprep.subr.mxu0 0.0
  %115 = vmatpush1.msra.mxu0 0.0
  %116 = vmatprep.subr.mxu0 0.0
  %117 = vmatpush1.msra.mxu0 0.0
  %118 = vmatprep.subr.mxu0 0.0
  %119 = vmatpush1.msra.mxu0 0.0
  %120 = vmatprep.subr.mxu0 0.0
  %121 = vmatpush1.msra.mxu0 0.0
  %122 = vmatprep.subr.mxu0 0.0
  %123 = vmatpush1.msra.mxu0 0.0
  %124 = vmatprep.subr.mxu0 0.0
  %125 = vmatpush1.msra.mxu0 0.0
  %126 = vmatprep.subr.mxu0 0.0
  %127 = vmatpush1.msra.mxu0 0.0
  %128 = vmatprep.subr.mxu0 0.0
  %129 = vmatpush1.msra.mxu0 0.0
  %130 = vmatprep.subr.mxu0 0.0
  %131 = vmatpush1.msra.mxu0 0.0
  %132 = vmatprep.subr.mxu0 0.0
  %133 = vmatpush1.msra.mxu0 0.0
  %134 = vmatprep.subr.mxu0 0.0
  %135 = vmatpush1.msra.mxu0 0.0
  %136 = vmatprep.subr.mxu0 0.0
  %137 = vmatpush1.msra.mxu0 0.0
  %138 = vmatprep.subr.mxu0 0.0
  %139 = vmatpush1.msra.mxu0 0.0
  %140 = vmatprep.subr.mxu0 0.0
  %141 = vmatpush1.msra.mxu0 0.0
  %142 = vmatprep.subr.mxu0 0.0
  %143 = vmatpush1.msra.mxu0 0.0
  %144 = vmatprep.subr.mxu0 0.0
  %145 = vmatpush1.msra.mxu0 0.0
  %146 = vmatprep.subr.mxu0 0.0
  %147 = vmatpush1.msra.mxu0 0.0
  %148 = vmatprep.subr.mxu0 0.0
  %149 = vmatpush1.msra.mxu0 0.0
  %150 = vmatprep.subr.mxu0 0.0
  %151 = vmatpush1.msra.mxu0 0.0
  %152 = vmatprep.subr.mxu0 0.0
  %153 = vmatpush1.msra.mxu0 0.0
  %154 = vmatprep.mubr.f32.mxu0 0.0
  %155 = vmatmul.mubr.f32.gmra.mrb[0].mxu0 %v43
  %v156 = vpop.f32.mrb[0].mxu0
  %v157 = vadd.f32 %v39, %v156
  %v158 = vpop.f32.mrb[0].mxu0
  %159 = vmatprep.mubr.f32.mxu0 0.0
  %160 = vmatmul.mubr.f32.gmra.mrb[0].mxu0 %v46
  %v161 = vpop.f32.mrb[0].mxu0
  %v162 = vadd.f32 %v39, %v161
  %v163 = vpop.f32.mrb[0].mxu0
  %164 = vmatprep.mubr.f32.mxu0 0.0
  %165 = vmatmul.mubr.f32.gmra.mrb[0].mxu0 %v49
  %v166 = vpop.f32.mrb[0].mxu0
  %v167 = vadd.f32 %v39, %v166
  %v168 = vpop.f32.mrb[0].mxu0
  %169 = vmatprep.mubr.f32.mxu0 0.0
  %170 = vmatmul.mubr.f32.gmra.mrb[0].mxu0 %v52
  %v171 = vpop.f32.mrb[0].mxu0
  %v172 = vadd.f32 %v39, %v171
  %v173 = vpop.f32.mrb[0].mxu0
  %174 = vmatprep.mubr.f32.mxu0 0.0
  %175 = vmatmul.mubr.f32.gmra.mrb[0].mxu0 %v55
  %v176 = vpop.f32.mrb[0].mxu0
  %v177 = vadd.f32 %v39, %v176
  %v178 = vpop.f32.mrb[0].mxu0
  %179 = vmatprep.mubr.f32.mxu0 0.0
  %180 = vmatmul.mubr.f32.gmra.mrb[0].mxu0 %v58
  %v181 = vpop.f32.mrb[0].mxu0
  %v182 = vadd.f32 %v39, %v181
  %v183 = vpop.f32.mrb[0].mxu0
  %184 = vmatprep.mubr.f32.mxu0 0.0
  %185 = vmatmul.mubr.f32.gmra.mrb[0].mxu0 %v61
  %v186 = vpop.f32.mrb[0].mxu0
  %v187 = vadd.f32 %v39, %v186
  %v188 = vpop.f32.mrb[0].mxu0
  %189 = vmatprep.mubr.f32.mxu0 0.0
  %190 = vmatmul.mubr.f32.gmra.mrb[0].mxu0 %v64
  %v191 = vpop.f32.mrb[0].mxu0
  %v192 = vadd.f32 %v39, %v191
  %v193 = vpop.f32.mrb[0].mxu0
  %194 = vmatprep.mubr.f32.mxu0 0.0
  %195 = vmatmul.mubr.f32.gmra.mrb[0].mxu0 %v67
  %v196 = vpop.f32.mrb[0].mxu0
  %v197 = vadd.f32 %v39, %v196
  %v198 = vpop.f32.mrb[0].mxu0
  %199 = vmatprep.mubr.f32.mxu0 0.0
  %200 = vmatmul.mubr.f32.gmra.mrb[0].mxu0 %v70
  %v201 = vpop.f32.mrb[0].mxu0
  %v202 = vadd.f32 %v39, %v201
  %v203 = vpop.f32.mrb[0].mxu0
  %204 = vmatprep.mubr.f32.mxu0 0.0
  %205 = vmatmul.mubr.f32.gmra.mrb[0].mxu0 %v73
  %v206 = vpop.f32.mrb[0].mxu0
  %v207 = vadd.f32 %v39, %v206
  %v208 = vpop.f32.mrb[0].mxu0
  %209 = vmatprep.mubr.f32.mxu0 0.0
  %210 = vmatmul.mubr.f32.gmra.mrb[0].mxu0 %v76
  %v211 = vpop.f32.mrb[0].mxu0
  %v212 = vadd.f32 %v39, %v211
  %v213 = vpop.f32.mrb[0].mxu0
  %214 = vmatprep.mubr.f32.mxu0 0.0
  %215 = vmatmul.mubr.f32.gmra.mrb[0].mxu0 %v79
  %v216 = vpop.f32.mrb[0].mxu0
  %v217 = vadd.f32 %v39, %v216
  %v218 = vpop.f32.mrb[0].mxu0
  %219 = vmatprep.mubr.f32.mxu0 0.0
  %220 = vmatmul.mubr.f32.gmra.mrb[0].mxu0 %v82
  %v221 = vpop.f32.mrb[0].mxu0
  %v222 = vadd.f32 %v39, %v221
  %v223 = vpop.f32.mrb[0].mxu0
  %224 = vmatprep.mubr.f32.mxu0 0.0
  %225 = vmatmul.mubr.f32.gmra.mrb[0].mxu0 %v85
  %v226 = vpop.f32.mrb[0].mxu0
  %v227 = vadd.f32 %v39, %v226
  %v228 = vpop.f32.mrb[0].mxu0
  %229 = vmatprep.mubr.f32.mxu0 0.0
  %230 = vmatmul.mubr.f32.gmra.mrb[0].mxu0 %v88
  %v231 = vpop.f32.mrb[0].mxu0
  %v232 = vadd.f32 %v39, %v231
  %v233 = vpop.f32.mrb[0].mxu0
  %234 = vdwg.mxu0
  %v235 = vlaneseq
  %v236 = vand.u32 %v235, 127
  %vm237 = vcmp.ge.s32.totalorder %v236, 27
  %v238 = vsel %vm237, -10000000.0, %v157
  %v239 = vsel %vm237, -10000000.0, %v162
  %v240 = vsel %vm237, -10000000.0, %v167
  %v241 = vsel %vm237, -10000000.0, %v172
  %v242 = vsel %vm237, -10000000.0, %v177
  %v243 = vsel %vm237, -10000000.0, %v182
  %v244 = vsel %vm237, -10000000.0, %v187
  %v245 = vsel %vm237, -10000000.0, %v192
  %v246 = vsel %vm237, -10000000.0, %v197
  %v247 = vsel %vm237, -10000000.0, %v202
  %v248 = vsel %vm237, -10000000.0, %v207
  %v249 = vsel %vm237, -10000000.0, %v212
  %v250 = vsel %vm237, -10000000.0, %v217
  %v251 = vsel %vm237, -10000000.0, %v222
  %v252 = vsel %vm237, -10000000.0, %v227
  %v253 = vsel %vm237, -10000000.0, %v232
  %vm254 = vcmask 539648
  %v255 = vsel %vm254, %v238, -inf
  %256 = vmax.xlane.f32.xlu0 %v255
  %v257 = vpop.xlane.xlu0 %256
  %v258 = vsel %vm254, %v239, -inf
  %259 = vmax.xlane.f32.xlu0 %v258
  %v260 = vpop.xlane.xlu0 %259
  %v261 = vsel %vm254, %v240, -inf
  %262 = vmax.xlane.f32.xlu0 %v261
  %v263 = vpop.xlane.xlu0 %262
  %v264 = vsel %vm254, %v241, -inf
  %265 = vmax.xlane.f32.xlu0 %v264
  %v266 = vpop.xlane.xlu0 %265
  %v267 = vsel %vm254, %v242, -inf
  %268 = vmax.xlane.f32.xlu0 %v267
  %v269 = vpop.xlane.xlu0 %268
  %v270 = vsel %vm254, %v243, -inf
  %271 = vmax.xlane.f32.xlu0 %v270
  %v272 = vpop.xlane.xlu0 %271
  %v273 = vsel %vm254, %v244, -inf
  %274 = vmax.xlane.f32.xlu0 %v273
  %v275 = vpop.xlane.xlu0 %274
  %v276 = vsel %vm254, %v245, -inf
  %277 = vmax.xlane.f32.xlu0 %v276
  %v278 = vpop.xlane.xlu0 %277
  %v279 = vsel %vm254, %v246, -inf
  %280 = vmax.xlane.f32.xlu0 %v279
  %v281 = vpop.xlane.xlu0 %280
  %v282 = vsel %vm254, %v247, -inf
  %283 = vmax.xlane.f32.xlu0 %v282
  %v284 = vpop.xlane.xlu0 %283
  %v285 = vsel %vm254, %v248, -inf
  %286 = vmax.xlane.f32.xlu0 %v285
  %v287 = vpop.xlane.xlu0 %286
  %v288 = vsel %vm254, %v249, -inf
  %289 = vmax.xlane.f32.xlu0 %v288
  %v290 = vpop.xlane.xlu0 %289
  %v291 = vsel %vm254, %v250, -inf
  %292 = vmax.xlane.f32.xlu0 %v291
  %v293 = vpop.xlane.xlu0 %292
  %v294 = vsel %vm254, %v251, -inf
  %295 = vmax.xlane.f32.xlu0 %v294
  %v296 = vpop.xlane.xlu0 %295
  %v297 = vsel %vm254, %v252, -inf
  %298 = vmax.xlane.f32.xlu0 %v297
  %v299 = vpop.xlane.xlu0 %298
  %v300 = vsel %vm254, %v253, -inf
  %301 = vmax.xlane.f32.xlu0 %v300
  %v302 = vpop.xlane.xlu0 %301
  %v303 = vsub.f32 %v238, %v257
  %v304 = vsub.f32 %v239, %v260
  %v305 = vsub.f32 %v240, %v263
  %v306 = vsub.f32 %v241, %v266
  %v307 = vsub.f32 %v242, %v269
  %v308 = vsub.f32 %v243, %v272
  %v309 = vsub.f32 %v244, %v275
  %v310 = vsub.f32 %v245, %v278
  %v311 = vsub.f32 %v246, %v281
  %v312 = vsub.f32 %v247, %v284
  %v313 = vsub.f32 %v248, %v287
  %v314 = vsub.f32 %v249, %v290
  %v315 = vsub.f32 %v250, %v293
  %v316 = vsub.f32 %v251, %v296
  %v317 = vsub.f32 %v252, %v299
  %v318 = vsub.f32 %v253, %v302
  %v319 = vmul.f32 %v303, 1.442695
  %v320 = vpow.pop %v319
  %v321 = vmul.f32 %v304, 1.442695
  %v322 = vpow.pop %v321
  %v323 = vmul.f32 %v305, 1.442695
  %v324 = vpow.pop %v323
  %v325 = vmul.f32 %v306, 1.442695
  %v326 = vpow.pop %v325
  %v327 = vmul.f32 %v307, 1.442695
  %v328 = vpow.pop %v327
  %v329 = vmul.f32 %v308, 1.442695
  %v330 = vpow.pop %v329
  %v331 = vmul.f32 %v309, 1.442695
  %v332 = vpow.pop %v331
  %v333 = vmul.f32 %v310, 1.442695
  %v334 = vpow.pop %v333
  %v335 = vmul.f32 %v311, 1.442695
  %v336 = vpow.pop %v335
  %v337 = vmul.f32 %v312, 1.442695
  %v338 = vpow.pop %v337
  %v339 = vmul.f32 %v313, 1.442695
  %v340 = vpow.pop %v339
  %v341 = vmul.f32 %v314, 1.442695
  %v342 = vpow.pop %v341
  %v343 = vmul.f32 %v315, 1.442695
  %v344 = vpow.pop %v343
  %v345 = vmul.f32 %v316, 1.442695
  %v346 = vpow.pop %v345
  %v347 = vmul.f32 %v317, 1.442695
  %v348 = vpow.pop %v347
  %v349 = vmul.f32 %v318, 1.442695
  %v350 = vpow.pop %v349
  %v351 = vsel %vm254, %v320, 0.0
  %352 = vadd.xlane.f32.xlu0 %v351
  %v353 = vpop.xlane.xlu0 %352
  %v354 = vsel %vm254, %v322, 0.0
  %355 = vadd.xlane.f32.xlu0 %v354
  %v356 = vpop.xlane.xlu0 %355
  %v357 = vsel %vm254, %v324, 0.0
  %358 = vadd.xlane.f32.xlu0 %v357
  %v359 = vpop.xlane.xlu0 %358
  %v360 = vsel %vm254, %v326, 0.0
  %361 = vadd.xlane.f32.xlu0 %v360
  %v362 = vpop.xlane.xlu0 %361
  %v363 = vsel %vm254, %v328, 0.0
  %364 = vadd.xlane.f32.xlu0 %v363
  %v365 = vpop.xlane.xlu0 %364
  %v366 = vsel %vm254, %v330, 0.0
  %367 = vadd.xlane.f32.xlu0 %v366
  %v368 = vpop.xlane.xlu0 %367
  %v369 = vsel %vm254, %v332, 0.0
  %370 = vadd.xlane.f32.xlu0 %v369
  %v371 = vpop.xlane.xlu0 %370
  %v372 = vsel %vm254, %v334, 0.0
  %373 = vadd.xlane.f32.xlu0 %v372
  %v374 = vpop.xlane.xlu0 %373
  %v375 = vsel %vm254, %v336, 0.0
  %376 = vadd.xlane.f32.xlu0 %v375
  %v377 = vpop.xlane.xlu0 %376
  %v378 = vsel %vm254, %v338, 0.0
  %379 = vadd.xlane.f32.xlu0 %v378
  %v380 = vpop.xlane.xlu0 %379
  %v381 = vsel %vm254, %v340, 0.0
  %382 = vadd.xlane.f32.xlu0 %v381
  %v383 = vpop.xlane.xlu0 %382
  %v384 = vsel %vm254, %v342, 0.0
  %385 = vadd.xlane.f32.xlu0 %v384
  %v386 = vpop.xlane.xlu0 %385
  %v387 = vsel %vm254, %v344, 0.0
  %388 = vadd.xlane.f32.xlu0 %v387
  %v389 = vpop.xlane.xlu0 %388
  %v390 = vsel %vm254, %v346, 0.0
  %391 = vadd.xlane.f32.xlu0 %v390
  %v392 = vpop.xlane.xlu0 %391
  %v393 = vsel %vm254, %v348, 0.0
  %394 = vadd.xlane.f32.xlu0 %v393
  %v395 = vpop.xlane.xlu0 %394
  %v396 = vsel %vm254, %v350, 0.0
  %397 = vadd.xlane.f32.xlu0 %v396
  %v398 = vpop.xlane.xlu0 %397
  %v399 = vrcp.pop %v353
  %v400 = vmul.f32 %v320, %v399
  %v401 = vrcp.pop %v356
  %v402 = vmul.f32 %v322, %v401
  %v403 = vrcp.pop %v359
  %v404 = vmul.f32 %v324, %v403
  %v405 = vrcp.pop %v362
  %v406 = vmul.f32 %v326, %v405
  %v407 = vrcp.pop %v365
  %v408 = vmul.f32 %v328, %v407
  %v409 = vrcp.pop %v368
  %v410 = vmul.f32 %v330, %v409
  %v411 = vrcp.pop %v371
  %v412 = vmul.f32 %v332, %v411
  %v413 = vrcp.pop %v374
  %v414 = vmul.f32 %v334, %v413
  %v415 = vrcp.pop %v377
  %v416 = vmul.f32 %v336, %v415
  %v417 = vrcp.pop %v380
  %v418 = vmul.f32 %v338, %v417
  %v419 = vrcp.pop %v383
  %v420 = vmul.f32 %v340, %v419
  %v421 = vrcp.pop %v386
  %v422 = vmul.f32 %v342, %v421
  %v423 = vrcp.pop %v389
  %v424 = vmul.f32 %v344, %v423
  %v425 = vrcp.pop %v392
  %v426 = vmul.f32 %v346, %v425
  %v427 = vrcp.pop %v395
  %v428 = vmul.f32 %v348, %v427
  %v429 = vrcp.pop %v398
  %v430 = vmul.f32 %v350, %v429
  %431 = vst.msk [vmem:[%s3] sm:$0xff] %vm254, %v400
  %432 = vst.msk [vmem:[%s3 + $0x8] sm:$0xff] %vm254, %v402
  %433 = vst.msk [vmem:[%s3 + $0x10] sm:$0xff] %vm254, %v404
  %434 = vst.msk [vmem:[%s3 + $0x18] sm:$0xff] %vm254, %v406
  %435 = vst.msk [vmem:[%s3 + $0x20] sm:$0xff] %vm254, %v408
  %436 = vst.msk [vmem:[%s3 + $0x28] sm:$0xff] %vm254, %v410
  %437 = vst.msk [vmem:[%s3 + $0x30] sm:$0xff] %vm254, %v412
  %438 = vst.msk [vmem:[%s3 + $0x38] sm:$0xff] %vm254, %v414
  %439 = vst.msk [vmem:[%s3 + $0x40] sm:$0xff] %vm254, %v416
  %440 = vst.msk [vmem:[%s3 + $0x48] sm:$0xff] %vm254, %v418
  %441 = vst.msk [vmem:[%s3 + $0x50] sm:$0xff] %vm254, %v420
  %442 = vst.msk [vmem:[%s3 + $0x58] sm:$0xff] %vm254, %v422
  %443 = vst.msk [vmem:[%s3 + $0x60] sm:$0xff] %vm254, %v424
  %444 = vst.msk [vmem:[%s3 + $0x68] sm:$0xff] %vm254, %v426
  %445 = vst.msk [vmem:[%s3 + $0x70] sm:$0xff] %vm254, %v428
  %446 = vst.msk [vmem:[%s3 + $0x78] sm:$0xff] %vm254, %v430
  // Predicated region
  $region14: #{tpu_custom_call.1} parent=0 // pred_check
    _
  $region15: #{tpu_custom_call.1} parent=0 // pred_check_branch
    %448 = sbr.rel (0) target = $region17
  $region16: #{tpu_custom_call.1} parent=0 // pred_region
    _
  $region17: #{tpu_custom_call.1} parent=0 // pred_fallthru
    _
  // Predicated region
  $region18: #{tpu_custom_call.1} parent=0 // pred_check
    _
  $region19: #{tpu_custom_call.1} parent=0 // pred_check_branch
    %450 = sbr.rel (0) target = $region21
  $region20: #{tpu_custom_call.1} parent=0 // pred_region
    _
  $region21: #{tpu_custom_call.1} parent=0 // pred_fallthru
    _

</llo_original>
